<compile_context>
chip_gen: v7x
topology: tpu7x:2x2x1
jax: 0.10.0
libtpu: 0.0.40
codegen_flags: <defaults>
</compile_context>

<pallas_src>
import jax
import jax.numpy as jnp
from jax import lax
from jax.experimental import pallas as pl
from jax.experimental.pallas import tpu as pltpu

EPS = 1e-7
LANE = 128
SUBLANE = 8


def _cdiv(a, b):
    return -(-a // b)


def _round_up(a, b):
    return _cdiv(a, b) * b


def _round_down(a, b):
    return (a // b) * b


def _chip_config():
    """Generation-aware VMEM capacity / combined block budget / TC count."""
    kind = ""
    try:
        kind = jax.devices()[0].device_kind.lower()
    except Exception:
        pass
    if "v7" in kind:
        cfg = {"vmem": 64 << 20, "two_tc": True, "budget": 20 << 20}
    elif "v6" in kind:
        cfg = {"vmem": 128 << 20, "two_tc": False, "budget": 40 << 20}
    elif "v5" in kind:
        cfg = {"vmem": 128 << 20, "two_tc": False, "budget": 24 << 20}
    else:  # unknown generation: conservative
        cfg = {"vmem": 64 << 20, "two_tc": False, "budget": 16 << 20}
    try:
        vmem_cap = int(pltpu.get_tpu_info().vmem_capacity_bytes)
        if vmem_cap > 0:
            cfg["vmem"] = vmem_cap
            # keep 2*budget + slack under ~80% of physical VMEM
            cfg["budget"] = max(4 << 20,
                                min(cfg["budget"], (vmem_cap * 2) // 5 - (4 << 20)))
    except Exception:
        pass
    return cfg


def _make_partial_kernel(mc, tc, kb, ch, total_blocks, masked):
    """Stream a (tb, tc, 128) block of x / target, accumulate lane+sublane-wide
    partial sums into resident (tb, 8, 128) f32 output blocks."""
    n_chunks = tc // ch

    def kernel(x_ref, t_ref, inter_ref, card_ref):
        # grid = (split [parallel], batch block [parallel], reduction [arbitrary])
        @pl.when(pl.program_id(2) == 0)
        def _():
            inter_ref[...] = jnp.zeros_like(inter_ref)
            card_ref[...] = jnp.zeros_like(card_ref)

        tb = x_ref.shape[0]

        if masked:
            g_raw = pl.program_id(0) * kb + pl.program_id(2)
            g = jnp.minimum(g_raw, total_blocks - 1)      # same clamp as index_map
            block_base = g * tc
            block_live = g_raw < total_blocks             # overflow iterations add 0

        def body(i, carry):
            acc_i, acc_c = carry
            off = pl.multiple_of(i * ch, ch)
            xs = x_ref[:, pl.ds(off, ch), :].astype(jnp.float32)   # (tb, ch, 128)
            ts = t_ref[:, pl.ds(off, ch), :].astype(jnp.float32)
            prod = xs * ts
            card = xs + ts
            if masked:
                pos = lax.broadcasted_iota(jnp.int32, (1, ch, LANE), 1)
                ok = jnp.logical_and(pos + (block_base + i * ch) < mc, block_live)
                prod = jnp.where(ok, prod, 0.0)
                card = jnp.where(ok, card, 0.0)
            # sum across whole vreg tiles only (pure VPU adds, no XLU relayout);
            # the within-vreg sublane/lane reduce is deferred to the epilogue.
            acc_i = acc_i + prod.reshape(tb, ch // SUBLANE, SUBLANE, LANE).sum(axis=1)
            acc_c = acc_c + card.reshape(tb, ch // SUBLANE, SUBLANE, LANE).sum(axis=1)
            return acc_i, acc_c

        zero = jnp.zeros((tb, SUBLANE, LANE), jnp.float32)
        acc_i, acc_c = lax.fori_loop(0, n_chunks, body, (zero, zero))
        inter_ref[...] += acc_i
        card_ref[...] += acc_c

    return kernel


def dice_loss_percentile(x, target, percentile_val, *,
                         max_block_bytes=None, num_splits=None):
    """x, target: (B, C, D, H, W) arrays (any float dtype). Returns f32 scalar.

    max_block_bytes: combined VMEM budget (bytes) for one (x, target) block
      pair per pipeline buffer; defaults to a generation-appropriate value.
    num_splits: independent reduction splits (2 engages both TensorCores on
      dual-TC chips); default chosen per generation.
    """
    assert x.shape == target.shape and x.ndim == 5
    B = int(x.shape[0])
    N = 1
    for d in x.shape[1:]:
        N *= int(d)

    cfg = _chip_config()
    budget = int(max_block_bytes) if max_block_bytes is not None else cfg["budget"]
    budget = max(budget, 1)

    isz_x = jnp.dtype(x.dtype).itemsize
    isz_t = jnp.dtype(target.dtype).itemsize
    isz_sum = isz_x + isz_t
    # sublane-tile multiple from the *narrowest* dtype so every input block is
    # natively tileable ((8,128) f32, (16,128) bf16, (32,128) 8-bit).
    packing = max(1, 4 // max(1, min(isz_x, isz_t)))
    sub = SUBLANE * packing

    # --- batch tiling: largest divisor of B whose minimal block fits budget ---
    row_bytes_min = sub * LANE * isz_sum
    cap = max(1, budget // row_bytes_min)
    tb = 1
    for d in range(1, B + 1):
        if B % d == 0 and d <= cap:
            tb = d
    nb = B // tb

    # --- inner strip-mine chunk: a few vregs per operand after f32 widening ---
    ch = max(sub, min(8 * sub, _round_down(max(sub, 160 // tb), sub)))

    # --- lane-dense view (free reshape for 128-aligned volumes, no jnp.pad) ---
    min_row = ch * LANE
    if N % LANE == 0 and N >= min_row:
        n_pad = N                          # zero-copy path
    else:
        # only unaligned / tiny volumes get a small zero pad (neutral for sums)
        n_pad = max(_round_up(N, LANE), min_row)
    mc = n_pad // LANE

    if n_pad == N:
        x3 = x.reshape(B, mc, LANE)
        t3 = target.reshape(B, mc, LANE)
    else:
        xf = jnp.pad(x.reshape(B, N), ((0, 0), (0, n_pad - N)))
        tf = jnp.pad(target.reshape(B, N), ((0, 0), (0, n_pad - N)))
        x3 = xf.reshape(B, mc, LANE)
        t3 = tf.reshape(B, mc, LANE)

    # --- reduction split (engage both TensorCores on dual-TC chips) -----------
    if num_splits is None:
        num_splits = 2 if (cfg["two_tc"] and mc >= 2 * ch) else 1
    num_splits = max(1, min(int(num_splits), mc // ch))

    # --- reduction block size from the budget ----------------------------------
    tc_budget = max(ch, _round_down(budget // (tb * LANE * isz_sum), ch))
    tc_split = _round_up(_cdiv(mc, num_splits), ch)
    tc_data = max(ch, _round_down(mc, ch))      # block never exceeds the array dim
    tc = max(ch, min(tc_budget, tc_split, tc_data))

    kb = _cdiv(mc, num_splits * tc)             # reduction steps per split
    total_blocks = _cdiv(mc, tc)
    masked = (num_splits * kb * tc != mc)       # ragged tail / overflow iterations

    if masked:
        def in_index(s, b, k):
            # clamp so no block starts past the array; overflow steps are masked
            return (b, jnp.minimum(s * kb + k, total_blocks - 1), 0)
    else:
        def in_index(s, b, k):
            return (b, s * kb + k, 0)

    def out_index(s, b, k):
        return (s, b, 0, 0)

    in_block_bytes = tb * tc * LANE * isz_sum
    out_block_bytes = 2 * tb * SUBLANE * LANE * 4
    vmem_limit = max(16 << 20,
                     min(2 * (in_block_bytes + out_block_bytes) + (8 << 20),
                         (cfg["vmem"] * 4) // 5))
    vmem_limit = int(min(vmem_limit, cfg["vmem"]))

    kernel = _make_partial_kernel(mc, tc, kb, ch, total_blocks, masked)

    inter_p, card_p = pl.pallas_call(
        kernel,
        out_shape=(
            jax.ShapeDtypeStruct((num_splits, B, SUBLANE, LANE), jnp.float32),
            jax.ShapeDtypeStruct((num_splits, B, SUBLANE, LANE), jnp.float32),
        ),
        grid_spec=pltpu.PrefetchScalarGridSpec(
            num_scalar_prefetch=0,
            grid=(num_splits, nb, kb),
            in_specs=[
                pl.BlockSpec((tb, tc, LANE), in_index),
                pl.BlockSpec((tb, tc, LANE), in_index),
            ],
            out_specs=(
                pl.BlockSpec((None, tb, SUBLANE, LANE), out_index),
                pl.BlockSpec((None, tb, SUBLANE, LANE), out_index),
            ),
        ),
        compiler_params=pltpu.CompilerParams(
            dimension_semantics=("parallel", "parallel", "arbitrary"),
            vmem_limit_bytes=vmem_limit,
        ),
    )(x3, t3)

    # --- tiny JAX epilogue: fold partials, dice, sort, percentile pick --------
    intersection = jnp.sum(inter_p, axis=(0, 2, 3))   # (B,)
    cardinality = jnp.sum(card_p, axis=(0, 2, 3))
    dice = 2.0 * intersection / (cardinality + EPS)
    dice_sorted = jnp.sort(dice)

    index = B - int(B * percentile_val / 100)   # same integer math as the module
    if not -B <= index < B:                     # torch's sorted(list)[index] would raise
        raise IndexError(
            f"percentile_val={percentile_val} gives index {index} outside [-{B}, {B})")
    return (1.0 - dice_sorted[index]).astype(jnp.float32)


def _reference(x, target, percentile_val):
    x = x.astype(jnp.float32)
    target = target.astype(jnp.float32)
    dims = (1, 2, 3, 4)
    intersection = jnp.sum(x * target, dims)
    cardinality = jnp.sum(x + target, dims)
    dice = 2.0 * intersection / (cardinality + EPS)
    dice_sorted = jnp.sort(dice)
    B = x.shape[0]
    index = B - int(B * percentile_val / 100)
    return 1.0 - dice_sorted[index]


if __name__ == "__main__":
    key = jax.random.PRNGKey(0)

    def make_inputs(shape, dtype, k):
        k1, k2 = jax.random.split(k)
        xv = jax.random.uniform(k1, shape, dtype=jnp.float32).astype(dtype)
        tv = (jax.random.uniform(k2, shape) > 0.5).astype(dtype)
        return xv, tv

    k1, k2, k3 = jax.random.split(key, 3)

    # 1) 128-aligned volume -> zero-copy path, default generation-aware config.
    x, t = make_inputs((2, 4, 8, 16, 16), jnp.float32, k1)
    out = jax.block_until_ready(dice_loss_percentile(x, t, 100.0))
    ref = _reference(x, t, 100.0)
    assert jnp.allclose(out, ref, rtol=1e-4, atol=1e-5), (out, ref)

    # 2) aligned volume with forced small blocks + 2-way split: multi-step
    #    reduction with a masked ragged tail block (still no padded copies).
    x, t = make_inputs((2, 4, 8, 16, 40), jnp.float32, k2)
    out = jax.block_until_ready(
        dice_loss_percentile(x, t, 50.0, max_block_bytes=48 * 1024, num_splits=2))
    ref = _reference(x, t, 50.0)
    assert jnp.allclose(out, ref, rtol=1e-4, atol=1e-5), (out, ref)

    # 3) bf16 inputs with an awkward (non-multiple-of-128) shape: tiny zero pad,
    #    (16,128)-tileable blocks via min-itemsize sublane packing.
    x, t = make_inputs((2, 3, 5, 7, 9), jnp.bfloat16, k3)
    out = jax.block_until_ready(dice_loss_percentile(x, t, 100.0))
    ref = _reference(x, t, 100.0)
    assert jnp.allclose(out, ref, rtol=1e-4, atol=1e-5), (out, ref)

    print("KERNEL_OK")
</pallas_src>

<mosaic_0001>
module attributes {stable_mosaic.version = 11 : i64} {
  func.func @kernel(%arg0: i32, %arg1: i32, %arg2: i32, %arg3: memref<2x64x128xf32, #tpu.memory_space<vmem>>, %arg4: memref<2x64x128xf32, #tpu.memory_space<vmem>>, %arg5: memref<1x2x8x128xf32, #tpu.memory_space<vmem>>, %arg6: memref<1x2x8x128xf32, #tpu.memory_space<vmem>>) attributes {dimension_semantics = [#tpu.dimension_semantics<parallel>, #tpu.dimension_semantics<parallel>, #tpu.dimension_semantics<arbitrary>], iteration_bounds = array<i64: 1, 1, 1>, scalar_prefetch = 0 : i64, scratch_operands = 0 : i64, tpu.core_type = #tpu.core_type<tc>, window_params = [{transform_indices = @transform_0, window_bounds = array<i64: 2, 64, 128>}, {transform_indices = @transform_1, window_bounds = array<i64: 2, 64, 128>}, {transform_indices = @transform_2, window_bounds = array<i64: 1, 2, 8, 128>}, {transform_indices = @transform_3, window_bounds = array<i64: 1, 2, 8, 128>}]} {
    %c0_i32 = arith.constant 0 : i32
    %0 = arith.cmpi eq, %arg2, %c0_i32 : i32
    %1 = arith.extui %0 : i1 to i32
    %c0_i32_0 = arith.constant 0 : i32
    %2 = arith.cmpi ne, %1, %c0_i32_0 : i32
    scf.if %2 {
      %cst_23 = arith.constant 0.000000e+00 : f32
      %30 = vector.broadcast %cst_23 : f32 to vector<2x8x128xf32>
      %c0_24 = arith.constant 0 : index
      %c0_25 = arith.constant 0 : index
      %c0_26 = arith.constant 0 : index
      %c0_27 = arith.constant 0 : index
      %31 = vector.load %arg5[%c0_24, %c0_25, %c0_26, %c0_27] : memref<1x2x8x128xf32, #tpu.memory_space<vmem>>, vector<1x2x8x128xf32>
      %32 = vector.shape_cast %31 : vector<1x2x8x128xf32> to vector<2x8x128xf32>
      %33 = vector.shape_cast %30 : vector<2x8x128xf32> to vector<1x2x8x128xf32>
      tpu.vector_store %arg5[%c0_24, %c0_25, %c0_26, %c0_27], %33 {strides = array<i32>} : memref<1x2x8x128xf32, #tpu.memory_space<vmem>>, vector<1x2x8x128xf32>,
      %cst_28 = arith.constant 0.000000e+00 : f32
      %34 = vector.broadcast %cst_28 : f32 to vector<2x8x128xf32>
      %c0_29 = arith.constant 0 : index
      %c0_30 = arith.constant 0 : index
      %c0_31 = arith.constant 0 : index
      %c0_32 = arith.constant 0 : index
      %35 = vector.load %arg6[%c0_29, %c0_30, %c0_31, %c0_32] : memref<1x2x8x128xf32, #tpu.memory_space<vmem>>, vector<1x2x8x128xf32>
      %36 = vector.shape_cast %35 : vector<1x2x8x128xf32> to vector<2x8x128xf32>
      %37 = vector.shape_cast %34 : vector<2x8x128xf32> to vector<1x2x8x128xf32>
      tpu.vector_store %arg6[%c0_29, %c0_30, %c0_31, %c0_32], %37 {strides = array<i32>} : memref<1x2x8x128xf32, #tpu.memory_space<vmem>>, vector<1x2x8x128xf32>,
    } else {
    }
    %cst = arith.constant 0.000000e+00 : f32
    %3 = vector.broadcast %cst : f32 to vector<2x8x128xf32>
    %c0_i32_1 = arith.constant 0 : i32
    %c64_i32 = arith.constant 64 : i32
    %4 = arith.muli %c0_i32_1, %c64_i32 : i32
    %5 = tpu.assume_multiple %4, 64 : i32
    %c0 = arith.constant 0 : index
    %6 = arith.index_cast %5 : i32 to index
    %c0_2 = arith.constant 0 : index
    %7 = vector.load %arg3[%c0, %6, %c0_2] : memref<2x64x128xf32, #tpu.memory_space<vmem>>, vector<2x64x128xf32>
    %c0_3 = arith.constant 0 : index
    %8 = arith.index_cast %5 : i32 to index
    %c0_4 = arith.constant 0 : index
    %9 = vector.load %arg4[%c0_3, %8, %c0_4] : memref<2x64x128xf32, #tpu.memory_space<vmem>>, vector<2x64x128xf32>
    %10 = arith.mulf %7, %9 : vector<2x64x128xf32>
    %11 = arith.addf %7, %9 : vector<2x64x128xf32>
    %12 = vector.shape_cast %10 : vector<2x64x128xf32> to vector<2x8x8x128xf32>
    %cst_5 = arith.constant dense<0.000000e+00> : vector<2x8x128xf32>
    %13 = vector.multi_reduction <add>, %12, %cst_5 [1] : vector<2x8x8x128xf32> to vector<2x8x128xf32>
    %14 = arith.addf %3, %13 : vector<2x8x128xf32>
    %15 = vector.shape_cast %11 : vector<2x64x128xf32> to vector<2x8x8x128xf32>
    %cst_6 = arith.constant dense<0.000000e+00> : vector<2x8x128xf32>
    %16 = vector.multi_reduction <add>, %15, %cst_6 [1] : vector<2x8x8x128xf32> to vector<2x8x128xf32>
    %17 = arith.addf %3, %16 : vector<2x8x128xf32>
    %c1_i32 = arith.constant 1 : i32
    %c0_7 = arith.constant 0 : index
    %c0_8 = arith.constant 0 : index
    %c0_9 = arith.constant 0 : index
    %c0_10 = arith.constant 0 : index
    %18 = vector.load %arg5[%c0_7, %c0_8, %c0_9, %c0_10] : memref<1x2x8x128xf32, #tpu.memory_space<vmem>>, vector<1x2x8x128xf32>
    %19 = vector.shape_cast %18 : vector<1x2x8x128xf32> to vector<2x8x128xf32>
    %20 = arith.addf %19, %14 : vector<2x8x128xf32>
    %c0_11 = arith.constant 0 : index
    %c0_12 = arith.constant 0 : index
    %c0_13 = arith.constant 0 : index
    %c0_14 = arith.constant 0 : index
    %21 = vector.load %arg5[%c0_11, %c0_12, %c0_13, %c0_14] : memref<1x2x8x128xf32, #tpu.memory_space<vmem>>, vector<1x2x8x128xf32>
    %22 = vector.shape_cast %21 : vector<1x2x8x128xf32> to vector<2x8x128xf32>
    %23 = vector.shape_cast %20 : vector<2x8x128xf32> to vector<1x2x8x128xf32>
    tpu.vector_store %arg5[%c0_11, %c0_12, %c0_13, %c0_14], %23 {strides = array<i32>} : memref<1x2x8x128xf32, #tpu.memory_space<vmem>>, vector<1x2x8x128xf32>,
    %c0_15 = arith.constant 0 : index
    %c0_16 = arith.constant 0 : index
    %c0_17 = arith.constant 0 : index
    %c0_18 = arith.constant 0 : index
    %24 = vector.load %arg6[%c0_15, %c0_16, %c0_17, %c0_18] : memref<1x2x8x128xf32, #tpu.memory_space<vmem>>, vector<1x2x8x128xf32>
    %25 = vector.shape_cast %24 : vector<1x2x8x128xf32> to vector<2x8x128xf32>
    %26 = arith.addf %25, %17 : vector<2x8x128xf32>
    %c0_19 = arith.constant 0 : index
    %c0_20 = arith.constant 0 : index
    %c0_21 = arith.constant 0 : index
    %c0_22 = arith.constant 0 : index
    %27 = vector.load %arg6[%c0_19, %c0_20, %c0_21, %c0_22] : memref<1x2x8x128xf32, #tpu.memory_space<vmem>>, vector<1x2x8x128xf32>
    %28 = vector.shape_cast %27 : vector<1x2x8x128xf32> to vector<2x8x128xf32>
    %29 = vector.shape_cast %26 : vector<2x8x128xf32> to vector<1x2x8x128xf32>
    tpu.vector_store %arg6[%c0_19, %c0_20, %c0_21, %c0_22], %29 {strides = array<i32>} : memref<1x2x8x128xf32, #tpu.memory_space<vmem>>, vector<1x2x8x128xf32>,
    return
  }
  func.func @transform_0(%arg0: i32, %arg1: i32, %arg2: i32) -> (i32, i32, i32) {
    %c1_i32 = arith.constant 1 : i32
    %0 = arith.muli %arg0, %c1_i32 : i32
    %1 = arith.addi %0, %arg2 : i32
    %c0_i32 = arith.constant 0 : i32
    %c0_i32_0 = arith.constant 0 : i32
    return %arg1, %1, %c0_i32 : i32, i32, i32
  }
  func.func @transform_1(%arg0: i32, %arg1: i32, %arg2: i32) -> (i32, i32, i32) {
    %c1_i32 = arith.constant 1 : i32
    %0 = arith.muli %arg0, %c1_i32 : i32
    %1 = arith.addi %0, %arg2 : i32
    %c0_i32 = arith.constant 0 : i32
    %c0_i32_0 = arith.constant 0 : i32
    return %arg1, %1, %c0_i32 : i32, i32, i32
  }
  func.func @transform_2(%arg0: i32, %arg1: i32, %arg2: i32) -> (i32, i32, i32, i32) {
    %c0_i32 = arith.constant 0 : i32
    %c0_i32_0 = arith.constant 0 : i32
    %c0_i32_1 = arith.constant 0 : i32
    return %arg0, %arg1, %c0_i32, %c0_i32_0 : i32, i32, i32, i32
  }
  func.func @transform_3(%arg0: i32, %arg1: i32, %arg2: i32) -> (i32, i32, i32, i32) {
    %c0_i32 = arith.constant 0 : i32
    %c0_i32_0 = arith.constant 0 : i32
    %c0_i32_1 = arith.constant 0 : i32
    return %arg0, %arg1, %c0_i32, %c0_i32_0 : i32, i32, i32, i32
  }
}

</mosaic_0001>

<llo_original>
// kernel: tpu_custom_call.1
$region0: #{tpu_custom_call.1}
  #allocation0 [shape = 'u32[]', space=smem, size = 0x4, offset = 0x4, fixed_abs, tag = 'smem constant byte address 0x4 - core index']
  #allocation1 [shape = 'u32[144,128]{1,0:T(1,128)}', space=vmem, size = 0x12000, scoped, tag = 'internal scratch']
  %s0 = inlined_call_operand.hbm [shape: f32[2,64,128], index: 0, kind: input, shape index: {}]
  %s1 = inlined_call_operand.hbm [shape: f32[2,64,128], index: 1, kind: input, shape index: {}]
  %s2 = inlined_call_operand.hbm [shape: f32[1,2,8,128], index: 2, kind: output, shape index: {0}]
  %s3 = inlined_call_operand.hbm [shape: f32[1,2,8,128], index: 3, kind: output, shape index: {1}]
  %4 = xla_tuple %s2, %s3
  %s5 = sld [smem:[#allocation0]]
  $region38: #{tpu_custom_call.1} parent=0
    _
  %s7 = ssub.s32 1, %s5
  %s8 = scalar_select 0, %s7, %s5
  $region1: #{tpu_custom_call.1} parent=0
    #allocation2 [shape = 'u8[65536]{0}', space=vmem, size = 0x10000, scoped, tag = 'input window, operand 0, single buffered']
    #allocation3 [shape = 's32[1]{0}', space=sflag, size = 0x4, scoped, tag = 'scoped memory for tpu_custom_call.1']
    #allocation4 [shape = 's32[1]{0}', space=sflag, size = 0x4, scoped, tag = 'scoped memory for tpu_custom_call.1']
    #allocation5 [shape = 'u8[65536]{0}', space=vmem, size = 0x10000, scoped, tag = 'input window, operand 1, single buffered']
    #allocation6 [shape = 's32[1]{0}', space=sflag, size = 0x4, scoped, tag = 'scoped memory for tpu_custom_call.1']
    #allocation7 [shape = 'u8[8192]{0}', space=vmem, size = 0x2000, scoped, tag = 'output window, operand 0, single buffered']
    #allocation8 [shape = 'u8[8192]{0}', space=vmem, size = 0x2000, scoped, tag = 'output window, operand 1, single buffered']
    #allocation9 [shape = 's32[1]{0}', space=sflag, size = 0x4, scoped, tag = 'scoped memory for tpu_custom_call.1']
    %9 = vsyncpa [#allocation3], 0
    %10 = vsyncpa [#allocation6], 0
    %11 = vsyncpa [#allocation4], 0
    %12 = vsyncpa [#allocation9], 0
    // Predicated region
    $region2: #{tpu_custom_call.1} parent=1 // pred_check
      _
    $region3: #{tpu_custom_call.1} parent=1 // pred_check_branch
      %14 = sbr.rel (0) target = $region5
    $region4: #{tpu_custom_call.1} parent=1 // pred_region
      %s15 = sadd.s32 0, 0
      %s16 = smul.u32 8, %s15
      %s18 = ssub.s32 2048, 2048
      %19 = vsyncadd [#allocation3], %s18
      %s20 = smul.addr %s16, 128
      %s21 = scalar_lea.hbm %s0, %s20
      %s22 = sshll.u32 [#allocation2], 4
      %s23 = int_to_ptr.vmem [resolvable:$true] %s22
      %28 = dma.hbm_to_vmem [thread:$0]  %s21, 2048, %s23, [#allocation3], 128, 128, 8
    $region5: #{tpu_custom_call.1} parent=1 // pred_fallthru
      _
    // Predicated region
    $region6: #{tpu_custom_call.1} parent=1 // pred_check
      _
    $region7: #{tpu_custom_call.1} parent=1 // pred_check_branch
      %30 = sbr.rel (0) target = $region9
    $region8: #{tpu_custom_call.1} parent=1 // pred_region
      %s31 = sadd.s32 0, 0
      %s32 = smul.u32 8, %s31
      %s34 = ssub.s32 2048, 2048
      %35 = vsyncadd [#allocation6], %s34
      %s36 = smul.addr %s32, 128
      %s37 = scalar_lea.hbm %s1, %s36
      %s38 = sshll.u32 [#allocation5], 4
      %s39 = int_to_ptr.vmem [resolvable:$true] %s38
      %44 = dma.hbm_to_vmem [thread:$0]  %s37, 2048, %s39, [#allocation6], 128, 128, 8
    $region9: #{tpu_custom_call.1} parent=1 // pred_fallthru
      _
    // Predicated region
    $region10: #{tpu_custom_call.1} parent=1 // pred_check
      _
    $region11: #{tpu_custom_call.1} parent=1 // pred_check_branch
      %46 = sbr.rel (0) target = $region13
    $region12: #{tpu_custom_call.1} parent=1 // pred_region
      %47 = dma.done [#allocation3], 2048
    $region13: #{tpu_custom_call.1} parent=1 // pred_fallthru
      _
    // Predicated region
    $region14: #{tpu_custom_call.1} parent=1 // pred_check
      _
    $region15: #{tpu_custom_call.1} parent=1 // pred_check_branch
      %49 = sbr.rel (0) target = $region17
    $region16: #{tpu_custom_call.1} parent=1 // pred_region
      %50 = dma.done [#allocation6], 2048
    $region17: #{tpu_custom_call.1} parent=1 // pred_fallthru
      _
    %s51 = sadd.s32 0, 0
    %s52 = smul.u32 8, %s51
    %s53 = sadd.s32 0, 0
    %s54 = smul.u32 8, %s53
    %p55 = scmp.eq.s32.totalorder 0, 0
    // Predicated region
    $region18: #{tpu_custom_call.1} parent=1 // pred_check
      %p56 = pneg %p55
    $region19: #{tpu_custom_call.1} parent=1 // pred_check_branch
      %58 = sbr.rel (%p56) target = $region21
    $region20: #{tpu_custom_call.1} parent=1 // pred_region
      %59 = vst [vmem:[#allocation7] sm:$0xff] 0.0
      %60 = vst [vmem:[#allocation7 + $0x8] sm:$0xff] 0.0
      %61 = vst [vmem:[#allocation8] sm:$0xff] 0.0
      %62 = vst [vmem:[#allocation8 + $0x8] sm:$0xff] 0.0
    $region21: #{tpu_custom_call.1} parent=1 // pred_fallthru
      _
    %v63 = vld [vmem:[#allocation2] sm:$0xff]
    %v64 = vld [vmem:[#allocation2 + $0x8] sm:$0xff]
    %v65 = vld [vmem:[#allocation2 + $0x10] sm:$0xff]
    %v66 = vld [vmem:[#allocation2 + $0x18] sm:$0xff]
    %v67 = vld [vmem:[#allocation2 + $0x20] sm:$0xff]
    %v68 = vld [vmem:[#allocation2 + $0x28] sm:$0xff]
    %v69 = vld [vmem:[#allocation2 + $0x30] sm:$0xff]
    %v70 = vld [vmem:[#allocation2 + $0x38] sm:$0xff]
    %v71 = vld [vmem:[#allocation2 + $0x40] sm:$0xff]
    %v72 = vld [vmem:[#allocation2 + $0x48] sm:$0xff]
    %v73 = vld [vmem:[#allocation2 + $0x50] sm:$0xff]
    %v74 = vld [vmem:[#allocation2 + $0x58] sm:$0xff]
    %v75 = vld [vmem:[#allocation2 + $0x60] sm:$0xff]
    %v76 = vld [vmem:[#allocation2 + $0x68] sm:$0xff]
    %v77 = vld [vmem:[#allocation2 + $0x70] sm:$0xff]
    %v78 = vld [vmem:[#allocation2 + $0x78] sm:$0xff]
    %v79 = vld [vmem:[#allocation5] sm:$0xff]
    %v80 = vld [vmem:[#allocation5 + $0x8] sm:$0xff]
    %v81 = vld [vmem:[#allocation5 + $0x10] sm:$0xff]
    %v82 = vld [vmem:[#allocation5 + $0x18] sm:$0xff]
    %v83 = vld [vmem:[#allocation5 + $0x20] sm:$0xff]
    %v84 = vld [vmem:[#allocation5 + $0x28] sm:$0xff]
    %v85 = vld [vmem:[#allocation5 + $0x30] sm:$0xff]
    %v86 = vld [vmem:[#allocation5 + $0x38] sm:$0xff]
    %v87 = vld [vmem:[#allocation5 + $0x40] sm:$0xff]
    %v88 = vld [vmem:[#allocation5 + $0x48] sm:$0xff]
    %v89 = vld [vmem:[#allocation5 + $0x50] sm:$0xff]
    %v90 = vld [vmem:[#allocation5 + $0x58] sm:$0xff]
    %v91 = vld [vmem:[#allocation5 + $0x60] sm:$0xff]
    %v92 = vld [vmem:[#allocation5 + $0x68] sm:$0xff]
    %v93 = vld [vmem:[#allocation5 + $0x70] sm:$0xff]
    %v94 = vld [vmem:[#allocation5 + $0x78] sm:$0xff]
    %v95 = vmul.f32 %v63, %v79
    %v96 = vmul.f32 %v64, %v80
    %v97 = vmul.f32 %v65, %v81
    %v98 = vmul.f32 %v66, %v82
    %v99 = vmul.f32 %v67, %v83
    %v100 = vmul.f32 %v68, %v84
    %v101 = vmul.f32 %v69, %v85
    %v102 = vmul.f32 %v70, %v86
    %v103 = vmul.f32 %v71, %v87
    %v104 = vmul.f32 %v72, %v88
    %v105 = vmul.f32 %v73, %v89
    %v106 = vmul.f32 %v74, %v90
    %v107 = vmul.f32 %v75, %v91
    %v108 = vmul.f32 %v76, %v92
    %v109 = vmul.f32 %v77, %v93
    %v110 = vmul.f32 %v78, %v94
    %v111 = vadd.f32 %v63, %v79
    %v112 = vadd.f32 %v64, %v80
    %v113 = vadd.f32 %v65, %v81
    %v114 = vadd.f32 %v66, %v82
    %v115 = vadd.f32 %v67, %v83
    %v116 = vadd.f32 %v68, %v84
    %v117 = vadd.f32 %v69, %v85
    %v118 = vadd.f32 %v70, %v86
    %v119 = vadd.f32 %v71, %v87
    %v120 = vadd.f32 %v72, %v88
    %v121 = vadd.f32 %v73, %v89
    %v122 = vadd.f32 %v74, %v90
    %v123 = vadd.f32 %v75, %v91
    %v124 = vadd.f32 %v76, %v92
    %v125 = vadd.f32 %v77, %v93
    %v126 = vadd.f32 %v78, %v94
    %v127 = vadd.f32 %v95, %v96
    %v128 = vadd.f32 %v127, %v97
    %v129 = vadd.f32 %v128, %v98
    %v130 = vadd.f32 %v129, %v99
    %v131 = vadd.f32 %v130, %v100
    %v132 = vadd.f32 %v131, %v101
    %v133 = vadd.f32 %v132, %v102
    %v134 = vadd.f32 %v103, %v104
    %v135 = vadd.f32 %v134, %v105
    %v136 = vadd.f32 %v135, %v106
    %v137 = vadd.f32 %v136, %v107
    %v138 = vadd.f32 %v137, %v108
    %v139 = vadd.f32 %v138, %v109
    %v140 = vadd.f32 %v139, %v110
    %v141 = vadd.f32 %v133, 0.0
    %v142 = vadd.f32 %v140, 0.0
    %v143 = vadd.f32 %v111, %v112
    %v144 = vadd.f32 %v143, %v113
    %v145 = vadd.f32 %v144, %v114
    %v146 = vadd.f32 %v145, %v115
    %v147 = vadd.f32 %v146, %v116
    %v148 = vadd.f32 %v147, %v117
    %v149 = vadd.f32 %v148, %v118
    %v150 = vadd.f32 %v119, %v120
    %v151 = vadd.f32 %v150, %v121
    %v152 = vadd.f32 %v151, %v122
    %v153 = vadd.f32 %v152, %v123
    %v154 = vadd.f32 %v153, %v124
    %v155 = vadd.f32 %v154, %v125
    %v156 = vadd.f32 %v155, %v126
    %v157 = vadd.f32 %v149, 0.0
    %v158 = vadd.f32 %v156, 0.0
    %v159 = vld [vmem:[#allocation7] sm:$0xff]
    %v160 = vld [vmem:[#allocation7 + $0x8] sm:$0xff]
    %v161 = vadd.f32 %v159, %v141
    %v162 = vadd.f32 %v160, %v142
    %163 = vst [vmem:[#allocation7] sm:$0xff] %v161
    %164 = vst [vmem:[#allocation7 + $0x8] sm:$0xff] %v162
    %v165 = vld [vmem:[#allocation8] sm:$0xff]
    %v166 = vld [vmem:[#allocation8 + $0x8] sm:$0xff]
    %v167 = vadd.f32 %v165, %v157
    %v168 = vadd.f32 %v166, %v158
    %169 = vst [vmem:[#allocation8] sm:$0xff] %v167
    %170 = vst [vmem:[#allocation8 + $0x8] sm:$0xff] %v168
    // Predicated region
    $region22: #{tpu_custom_call.1} parent=1 // pred_check
      _
    $region23: #{tpu_custom_call.1} parent=1 // pred_check_branch
      %172 = sbr.rel (0) target = $region25
    $region24: #{tpu_custom_call.1} parent=1 // pred_region
      %s174 = ssub.s32 256, 256
      %175 = vsyncadd [#allocation4], %s174
      %s176 = sshll.u32 [#allocation7], 4
      %s177 = int_to_ptr.vmem [resolvable:$true] %s176
      %182 = dma.vmem_to_hbm [thread:$0]  %s177, 256, %s2, [#allocation4], 128, 128, 8
    $region25: #{tpu_custom_call.1} parent=1 // pred_fallthru
      _
    // Predicated region
    $region26: #{tpu_custom_call.1} parent=1 // pred_check
      _
    $region27: #{tpu_custom_call.1} parent=1 // pred_check_branch
      %184 = sbr.rel (0) target = $region29
    $region28: #{tpu_custom_call.1} parent=1 // pred_region
      %s186 = ssub.s32 256, 256
      %187 = vsyncadd [#allocation9], %s186
      %s188 = sshll.u32 [#allocation8], 4
      %s189 = int_to_ptr.vmem [resolvable:$true] %s188
      %194 = dma.vmem_to_hbm [thread:$0]  %s189, 256, %s3, [#allocation9], 128, 128, 8
    $region29: #{tpu_custom_call.1} parent=1 // pred_fallthru
      _
    // Predicated region
    $region30: #{tpu_custom_call.1} parent=1 // pred_check
      _
    $region31: #{tpu_custom_call.1} parent=1 // pred_check_branch
      %196 = sbr.rel (0) target = $region33
    $region32: #{tpu_custom_call.1} parent=1 // pred_region
      %197 = dma.done [#allocation4], 256
    $region33: #{tpu_custom_call.1} parent=1 // pred_fallthru
      _
    // Predicated region
    $region34: #{tpu_custom_call.1} parent=1 // pred_check
      _
    $region35: #{tpu_custom_call.1} parent=1 // pred_check_branch
      %199 = sbr.rel (0) target = $region37
    $region36: #{tpu_custom_call.1} parent=1 // pred_region
      %200 = dma.done [#allocation9], 256
    $region37: #{tpu_custom_call.1} parent=1 // pred_fallthru
      _
    %201 = vsyncpa [#allocation3], 1
    %202 = vsyncpa [#allocation6], 1
    %203 = vsyncpa [#allocation4], 1
    %204 = vsyncpa [#allocation9], 1

</llo_original>
